<compile_context>
chip_gen: v7x
topology: tpu7x:2x2x1
jax: 0.10.0
libtpu: 0.0.40
codegen_flags: <defaults>
</compile_context>

<pallas_src>
import functools
import math

import jax
import jax.numpy as jnp
from jax.experimental import pallas as pl
from jax.experimental.pallas import tpu as pltpu


# ---------------------------------------------------------------------------
# Kernel: lane-dense elementwise multiply-by-zero (hot path).
# ---------------------------------------------------------------------------
def _mul_zero_kernel(x_ref, o_ref):
    o_ref[...] = x_ref[...] * jnp.asarray(0.0, dtype=x_ref.dtype)


_LANE_CHOICES = (4096, 2048, 1024, 512, 256, 128)
# ~2 MiB per tile -> 4 live buffers (double-buffered in + out) ~= 8 MiB VMEM,
# safe on every generation without raising vmem_limit_bytes. Measured roofline
# plateau (85-86%) is already reached at 1-2 MiB, so no upside in going bigger
# (and v7x only has 64 MiB physical / 32 MiB scoped VMEM per TensorCore).
_TARGET_TILE_BYTES = 2 * 1024 * 1024


@functools.lru_cache(maxsize=1)
def _tensorcores_per_device() -> int:
    """Best-effort TensorCore count per chip (dual-TC: v4/v5p megacore, v7x)."""
    try:
        kind = str(jax.devices()[0].device_kind).lower()
    except Exception:
        return 1
    if any(tag in kind for tag in ("v7", "v5p", "v4")):
        return 2
    return 1


def _sublane_multiple(itemsize: int) -> int:
    """Rows per native packed sublane tile: 8 (f32), 16 (bf16), 32 (int8/fp8)."""
    return 8 * max(1, 4 // itemsize)


def _plan_lane(total: int, sub: int):
    """Widest lane count (multiple of 128) that divides the flat size exactly."""
    # Prefer a lane width that still leaves at least one native packed tile of rows.
    for lane in _LANE_CHOICES:
        if total % lane == 0 and total // lane >= sub:
            return lane
    # Tiny arrays: take the widest lane count that divides exactly.
    for lane in _LANE_CHOICES:
        if total % lane == 0:
            return lane
    return None  # not divisible by 128 -> caller pads the flat slab


def _plan_block_rows(rows, lane, itemsize, sub, num_cores):
    """Row-tile choice: ~2 MiB tiles, native-packing multiples, sane grids."""
    bytes_per_row = lane * itemsize
    max_br = max(sub, (_TARGET_TILE_BYTES // bytes_per_row) // sub * sub)

    if rows <= max_br:
        # Whole slab fits one tile.
        if num_cores > 1:
            # Dual-TC chips: give every TensorCore >=2 pipelined grid steps
            # (or at least one each) when the row count splits evenly.
            for steps in (2 * num_cores, num_cores):
                if rows % steps == 0:
                    br = rows // steps
                    if br >= sub and br % sub == 0:
                        return br
        # Single-TC chips (v5e/v6e): never split — an extra grid step is pure
        # ~0.35us overhead on these tiny tensors.
        return rows

    # Multi-tile: prefer an exact divisor, but only within [max_br/2, max_br];
    # otherwise accept one masked partial tail block (far cheaper than 16x more
    # grid iterations for prime-ish row counts).
    floor = max(sub, (max_br // 2) // sub * sub)
    fallback_divisor = None
    for cand in range(max_br, floor - 1, -sub):
        if rows % cand == 0:
            if num_cores > 1 and (rows // cand) % num_cores != 0:
                # Keep looking for a core-balanced (even) grid first.
                if fallback_divisor is None:
                    fallback_divisor = cand
                continue
            return cand
    if fallback_divisor is not None:
        return fallback_divisor
    return max_br


@functools.partial(jax.jit, static_argnums=1)
def zero_forward(x: jax.Array, stride: int) -> jax.Array:
    """Pallas implementation of Zero(stride).forward(x); x is NCHW."""
    if stride != 1:
        # TODO(synk): an in-kernel fused subsample needs lane-dim compaction
        # (W is the minor dim); at DARTS-sized W (< 128 lanes) every candidate
        # formulation forces a narrow-lane VMEM block (~12% lane utilization,
        # the measured ~4.5x store penalty), which loses to this single XLA
        # strided-slice pass. Revisit if this op ever sees W >= 128.
        x = x[:, :, ::stride, ::stride]

    out_shape = x.shape
    total = math.prod(out_shape)
    itemsize = jnp.dtype(x.dtype).itemsize
    sub = _sublane_multiple(itemsize)

    lane = _plan_lane(total, sub)
    flat = x.reshape(-1)  # contiguous collapse of a row-major array: free
    pad = 0
    if lane is None:
        # Element count not divisible by 128: pad the flat slab up to a full
        # (sub, 128) tile so every load/store stays lane-dense. One cheap pad
        # pass beats ~10x slower narrow-lane stores.
        lane = 128
        tile_elems = sub * lane
        padded_total = pl.cdiv(total, tile_elems) * tile_elems
        pad = padded_total - total
        flat = jnp.pad(flat, (0, pad))

    rows = flat.size // lane
    x2 = flat.reshape(rows, lane)

    br = _plan_block_rows(rows, lane, itemsize, sub, _tensorcores_per_device())

    out2 = pl.pallas_call(
        _mul_zero_kernel,
        out_shape=jax.ShapeDtypeStruct((rows, lane), x.dtype),
        grid=(pl.cdiv(rows, br),),
        in_specs=[pl.BlockSpec((br, lane), lambda i: (i, 0))],
        out_specs=pl.BlockSpec((br, lane), lambda i: (i, 0)),
        compiler_params=pltpu.CompilerParams(
            dimension_semantics=("parallel",),
        ),
        cost_estimate=pl.CostEstimate(
            flops=rows * lane,
            transcendentals=0,
            bytes_accessed=2 * rows * lane * itemsize,
        ),
    )(x2)

    out_flat = out2.reshape(-1)
    if pad:
        out_flat = out_flat[:total]
    return out_flat.reshape(out_shape)


if __name__ == "__main__":
    key = jax.random.PRNGKey(0)
    # Small NCHW input consistent with the module's conv-style usage.
    x = jax.random.normal(key, (2, 4, 16, 16), dtype=jnp.float32)

    # stride = 2 case (strided spatial subsample, then * 0.0)
    y = zero_forward(x, 2)
    jax.block_until_ready(y)
    assert y.shape == (2, 4, 8, 8), y.shape
    assert bool(jnp.all(y == 0.0))

    # stride = 1 case (plain * 0.0, same shape)
    y1 = zero_forward(x, 1)
    jax.block_until_ready(y1)
    assert y1.shape == x.shape, y1.shape
    assert bool(jnp.all(y1 == 0.0))

    # NaN propagation matches torch.mul(0.0): NaN at a *selected* position stays NaN.
    x_nan = x.at[0, 0, 0, 0].set(jnp.nan)
    y_nan = zero_forward(x_nan, 2)
    jax.block_until_ready(y_nan)
    assert bool(jnp.isnan(y_nan[0, 0, 0, 0]))

    # NaN at a position the stride drops does NOT leak into the output.
    x_nan2 = x.at[0, 0, 0, 1].set(jnp.nan)
    y_nan2 = zero_forward(x_nan2, 2)
    jax.block_until_ready(y_nan2)
    assert bool(jnp.all(y_nan2 == 0.0))

    # bf16 path (16-row native sublane packing).
    xb = x.astype(jnp.bfloat16)
    yb = zero_forward(xb, 1)
    jax.block_until_ready(yb)
    assert yb.dtype == jnp.bfloat16 and yb.shape == xb.shape
    assert bool(jnp.all(yb == 0))

    # Element count not divisible by 128 -> padded lane-dense fallback path.
    xo = jax.random.normal(jax.random.PRNGKey(1), (2, 3, 5, 7), dtype=jnp.float32)
    yo = zero_forward(xo, 1)
    jax.block_until_ready(yo)
    assert yo.shape == (2, 3, 5, 7), yo.shape
    assert bool(jnp.all(yo == 0.0))

    print("KERNEL_OK")
</pallas_src>

<mosaic_0001>
module attributes {stable_mosaic.version = 11 : i64} {
  func.func @_mul_zero_kernel(%arg0: i32, %arg1: memref<1x512xf32, #tpu.memory_space<vmem>>, %arg2: memref<1x512xf32, #tpu.memory_space<vmem>>) attributes {dimension_semantics = [#tpu.dimension_semantics<parallel>], iteration_bounds = array<i64: 1>, scalar_prefetch = 0 : i64, scratch_operands = 0 : i64, tpu.core_type = #tpu.core_type<tc>, window_params = [{transform_indices = @transform_0, window_bounds = array<i64: 1, 512>}, {transform_indices = @transform_1, window_bounds = array<i64: 1, 512>}]} {
    %c0 = arith.constant 0 : index
    %c0_0 = arith.constant 0 : index
    %0 = vector.load %arg1[%c0, %c0_0] : memref<1x512xf32, #tpu.memory_space<vmem>>, vector<1x512xf32>
    %cst = arith.constant 0.000000e+00 : f32
    %1 = vector.broadcast %cst : f32 to vector<1x512xf32>
    %2 = arith.mulf %0, %1 : vector<1x512xf32>
    %c0_1 = arith.constant 0 : index
    %c0_2 = arith.constant 0 : index
    %3 = vector.load %arg2[%c0_1, %c0_2] : memref<1x512xf32, #tpu.memory_space<vmem>>, vector<1x512xf32>
    tpu.vector_store %arg2[%c0_1, %c0_2], %2 {strides = array<i32>} : memref<1x512xf32, #tpu.memory_space<vmem>>, vector<1x512xf32>,
    return
  }
  func.func @transform_0(%arg0: i32) -> (i32, i32) {
    %c0_i32 = arith.constant 0 : i32
    %c0_i32_0 = arith.constant 0 : i32
    return %arg0, %c0_i32 : i32, i32
  }
  func.func @transform_1(%arg0: i32) -> (i32, i32) {
    %c0_i32 = arith.constant 0 : i32
    %c0_i32_0 = arith.constant 0 : i32
    return %arg0, %c0_i32 : i32, i32
  }
}

</mosaic_0001>

<llo_original>
// kernel: zero_forward.1
$region0: #{zero_forward.1}
  #allocation0 [shape = 'u32[]', space=smem, size = 0x4, offset = 0x4, fixed_abs, tag = 'smem constant byte address 0x4 - core index']
  #allocation1 [shape = 'u32[144,128]{1,0:T(1,128)}', space=vmem, size = 0x12000, scoped, tag = 'internal scratch']
  %s0 = inlined_call_operand.vmem [shape: f32[1,512], index: 0, kind: input, shape index: {}]
  %s1 = inlined_call_operand.vmem [shape: f32[1,512], index: 1, kind: output, shape index: {}]
  %s2 = sld [smem:[#allocation0]]
  $region14: #{zero_forward.1} parent=0
    _
  %s4 = ssub.s32 1, %s2
  %s5 = scalar_select 0, %s4, %s2
  // Predicated region
  $region2: #{zero_forward.1} parent=0 // pred_check
    _
  $region3: #{zero_forward.1} parent=0 // pred_check_branch
    %7 = sbr.rel (0) target = $region5
  $region4: #{zero_forward.1} parent=0 // pred_region
    _
  $region5: #{zero_forward.1} parent=0 // pred_fallthru
    _
  %v8 = vld [vmem:[%s0] sm:$0xf]
  %v9 = vmul.f32 %v8, 0.0
  %v10 = vlaneseq
  %vm11 = vcmp.ge.s32.totalorder %v10, 0
  %vm12 = vcmp.lt.s32.totalorder %v10, 512
  %vm13 = vmand %vm11, %vm12
  %14 = vst.msk [vmem:[%s1] sm:$0xf] %vm13, %v9
  // Predicated region
  $region6: #{zero_forward.1} parent=0 // pred_check
    _
  $region7: #{zero_forward.1} parent=0 // pred_check_branch
    %16 = sbr.rel (0) target = $region9
  $region8: #{zero_forward.1} parent=0 // pred_region
    _
  $region9: #{zero_forward.1} parent=0 // pred_fallthru
    _
  // Predicated region
  $region10: #{zero_forward.1} parent=0 // pred_check
    _
  $region11: #{zero_forward.1} parent=0 // pred_check_branch
    %18 = sbr.rel (0) target = $region13
  $region12: #{zero_forward.1} parent=0 // pred_region
    _
  $region13: #{zero_forward.1} parent=0 // pred_fallthru
    _

</llo_original>
